<compile_context>
chip_gen: v6e
topology: v6e:2x2x1
jax: 0.10.0
libtpu: 0.0.40
codegen_flags: <defaults>
</compile_context>

<pallas_src>
import math

import jax
import jax.numpy as jnp
from jax.experimental import pallas as pl
from jax.experimental.pallas import tpu as pltpu


# ----------------------------- small helpers ------------------------------

def _round_up(v: int, m: int) -> int:
    return ((v + m - 1) // m) * m


def _sublane_multiple(dtype) -> int:
    # (sublane, 128) tiling rule: 8 for 4-byte, 16 for 2-byte, 32 for 1-byte.
    return {4: 8, 2: 16, 1: 32}.get(jnp.dtype(dtype).itemsize, 8)


def _pick_tiling(size: int, align: int, t_max: int, min_split: int = 1):
    """Pick (tile, padded_size) for one axis.

    * tile is a multiple of `align` (or the full extent when a single tile
      suffices, which needs no padding at all),
    * padded_size = n_tiles * tile >= size with minimal padding,
    * at least `min_split` tiles when there is enough work (v7x megacore).
    """
    aligned = _round_up(size, align)
    n_tiles = max(1, -(-aligned // t_max))
    if n_tiles < min_split and aligned >= min_split * align:
        n_tiles = min_split
    if n_tiles == 1:
        return size, size          # full-extent block: no alignment/pad needed
    tile = _round_up(-(-aligned // n_tiles), align)
    return tile, tile * n_tiles


# -------------------- path 1: weight resident in VMEM ---------------------

def _resident_kernel(x_ref, wt_ref, b_ref, o_ref):
    # x_ref : [tm, K]   streamed rows tile
    # wt_ref: [K,  N]   VMEM-resident weight (constant index_map)
    # b_ref : [1,  N]   VMEM-resident bias
    # o_ref : [tm, N]
    acc = jax.lax.dot_general(
        x_ref[...], wt_ref[...],
        dimension_numbers=(((1,), (0,)), ((), ())),
        preferred_element_type=jnp.float32,
    )
    o_ref[...] = (acc + b_ref[...]).astype(o_ref.dtype)


def _group_linear_resident(x2d, w_t, bias2d, out_dtype, tm, m_pad):
    rows, in_dim = x2d.shape
    out_dim = w_t.shape[1]

    if m_pad != rows:                              # guarded: usually a no-op
        x2d = jnp.pad(x2d, ((0, m_pad - rows), (0, 0)))

    grid = (m_pad // tm,)
    o_item = jnp.dtype(out_dtype).itemsize
    cost = pl.CostEstimate(
        flops=2 * rows * in_dim * out_dim,
        transcendentals=0,
        bytes_accessed=(x2d.size * x2d.dtype.itemsize
                        + w_t.size * w_t.dtype.itemsize
                        + bias2d.size * bias2d.dtype.itemsize
                        + m_pad * out_dim * o_item),
    )

    y = pl.pallas_call(
        _resident_kernel,
        out_shape=jax.ShapeDtypeStruct((m_pad, out_dim), out_dtype),
        grid_spec=pltpu.PrefetchScalarGridSpec(
            num_scalar_prefetch=0,
            grid=grid,
            in_specs=[
                pl.BlockSpec((tm, in_dim), lambda i: (i, 0)),        # x tile
                pl.BlockSpec((in_dim, out_dim), lambda i: (0, 0)),   # W (resident)
                pl.BlockSpec((1, out_dim), lambda i: (0, 0)),        # bias (resident)
            ],
            out_specs=pl.BlockSpec((tm, out_dim), lambda i: (i, 0)),
        ),
        compiler_params=pltpu.CompilerParams(
            dimension_semantics=("parallel",),
            vmem_limit_bytes=48 * 1024 * 1024,
        ),
        cost_estimate=cost,
    )(x2d, w_t, bias2d)

    return y[:rows] if m_pad != rows else y


# ------------------ path 2: tiled MNK grid (large weights) ----------------

def _tiled_kernel(x_ref, wt_ref, b_ref, o_ref, acc_ref):
    # x_ref : [tm, tk], wt_ref: [tk, tn], b_ref: [1, tn], o_ref: [tm, tn]
    # acc_ref: [tm, tn] f32 scratch, resident across the K steps.
    k = pl.program_id(2)

    prod = jax.lax.dot_general(
        x_ref[...], wt_ref[...],
        dimension_numbers=(((1,), (0,)), ((), ())),
        preferred_element_type=jnp.float32,
    )

    @pl.when(k == 0)
    def _():
        acc_ref[...] = prod          # overwrite: no memset + add pass

    @pl.when(k > 0)
    def _():
        acc_ref[...] += prod

    @pl.when(k == pl.num_programs(2) - 1)
    def _():
        o_ref[...] = (acc_ref[...] + b_ref[...]).astype(o_ref.dtype)


def _group_linear_tiled(x2d, w_t, bias2d, out_dtype,
                        tm_max=256, tn_max=512, tk_max=1024):
    rows, in_dim = x2d.shape
    out_dim = w_t.shape[1]
    sub = _sublane_multiple(x2d.dtype)

    tm, m_pad = _pick_tiling(rows, sub, tm_max,
                             min_split=2 if rows > 128 else 1)
    tn, n_pad = _pick_tiling(out_dim, 128, tn_max)
    tk, k_pad = _pick_tiling(in_dim, 128, tk_max)

    # Only the K pad is correctness-critical (zeros contribute nothing to the
    # contraction); M/N pads only create rows/cols that get sliced off.
    # All pads are guarded so aligned shapes skip the extra HBM pass.
    if (m_pad, k_pad) != (rows, in_dim):
        x2d = jnp.pad(x2d, ((0, m_pad - rows), (0, k_pad - in_dim)))
    if (k_pad, n_pad) != (in_dim, out_dim):
        w_t = jnp.pad(w_t, ((0, k_pad - in_dim), (0, n_pad - out_dim)))
    if n_pad != out_dim:
        bias2d = jnp.pad(bias2d, ((0, 0), (0, n_pad - out_dim)))

    grid = (m_pad // tm, n_pad // tn, k_pad // tk)
    o_item = jnp.dtype(out_dtype).itemsize
    cost = pl.CostEstimate(
        flops=2 * rows * in_dim * out_dim,
        transcendentals=0,
        bytes_accessed=(x2d.size * x2d.dtype.itemsize
                        + grid[0] * w_t.size * w_t.dtype.itemsize
                        + bias2d.size * bias2d.dtype.itemsize
                        + m_pad * n_pad * o_item),
    )

    y = pl.pallas_call(
        _tiled_kernel,
        out_shape=jax.ShapeDtypeStruct((m_pad, n_pad), out_dtype),
        grid_spec=pltpu.PrefetchScalarGridSpec(
            num_scalar_prefetch=0,
            grid=grid,
            in_specs=[
                pl.BlockSpec((tm, tk), lambda i, j, k: (i, k)),   # x tile
                pl.BlockSpec((tk, tn), lambda i, j, k: (k, j)),   # W^T tile
                pl.BlockSpec((1, tn), lambda i, j, k: (0, j)),    # bias tile
            ],
            out_specs=pl.BlockSpec((tm, tn), lambda i, j, k: (i, j)),
            scratch_shapes=[pltpu.VMEM((tm, tn), jnp.float32)],
        ),
        compiler_params=pltpu.CompilerParams(
            dimension_semantics=("parallel", "parallel", "arbitrary"),
            vmem_limit_bytes=48 * 1024 * 1024,
        ),
        cost_estimate=cost,
    )(x2d, w_t, bias2d)

    if (m_pad, n_pad) != (rows, out_dim):
        y = y[:rows, :out_dim]
    return y


# ------------------------------- wrapper -----------------------------------

_PALLAS_MIN_MACS = 1 << 18                  # below this, plain XLA wins
_RESIDENT_W_BYTES_MAX = 8 * 1024 * 1024     # weight VMEM-residency threshold
_RESIDENT_WS_BUDGET = 32 * 1024 * 1024      # safe even on v7x's 64 MiB VMEM
_RESIDENT_TM_MAX = 512


def group_linear(x, weight, bias, *, force_pallas=False, force_path=None,
                 compute_dtype=None):
    """y = x @ weight.T + bias over the last axis of x (GroupLinearLayer.forward).

    x      : [..., in_dim]
    weight : [out_dim, in_dim]   (PyTorch nn.Linear convention)
    bias   : [out_dim]
    compute_dtype : optional (e.g. jnp.bfloat16) to run the MXU contraction in
                    a lower precision; default keeps the module's f32 numerics.
    """
    in_dim = x.shape[-1]
    out_dim = weight.shape[0]
    lead_shape = x.shape[:-1]
    rows = int(math.prod(lead_shape)) if lead_shape else 1
    out_dtype = x.dtype

    if not force_pallas and rows * in_dim * out_dim < _PALLAS_MIN_MACS:
        # Tiny problem: XLA fuses this into surrounding ops; a kernel loses.
        return (x @ weight.T + bias).astype(out_dtype)

    x2d = x.reshape(rows, in_dim)
    w_t = weight.T                             # one-time host transpose: [K, N]
    bias2d = bias.reshape(1, out_dim).astype(jnp.float32)

    if compute_dtype is not None:
        x2d = x2d.astype(compute_dtype)
        w_t = w_t.astype(compute_dtype)

    sub = _sublane_multiple(x2d.dtype)
    x_item = x2d.dtype.itemsize
    w_item = w_t.dtype.itemsize
    o_item = jnp.dtype(out_dtype).itemsize
    w_bytes = in_dim * out_dim * w_item

    y2d = None
    if force_path != "tiled" and w_bytes <= _RESIDENT_W_BYTES_MAX:
        # Largest M tile whose double-buffered x/out stream + resident W fits.
        stream_budget = _RESIDENT_WS_BUDGET - 2 * w_bytes
        per_row_bytes = 2 * (in_dim * x_item + out_dim * o_item)
        tm_budget = stream_budget // per_row_bytes
        if tm_budget >= min(rows, sub):
            tm_max = max(sub, min(_RESIDENT_TM_MAX, int(tm_budget)))
            tm, m_pad = _pick_tiling(rows, sub, tm_max,
                                     min_split=2 if rows > 128 else 1)
            y2d = _group_linear_resident(x2d, w_t, bias2d, out_dtype, tm, m_pad)

    if y2d is None:
        y2d = _group_linear_tiled(x2d, w_t, bias2d, out_dtype)

    return y2d.reshape(*lead_shape, out_dim)


# --------------------------------- demo ------------------------------------

if __name__ == "__main__":
    key = jax.random.PRNGKey(0)

    def make_inputs(key, batch, num_blocks, in_dim, out_dim):
        a = 1.0 / math.sqrt(out_dim)
        kx, kw, kb = jax.random.split(key, 3)
        x = jax.random.normal(kx, (batch, num_blocks, in_dim), dtype=jnp.float32)
        w = jax.random.uniform(kw, (out_dim, in_dim), minval=-a, maxval=a,
                               dtype=jnp.float32)
        b = jax.random.uniform(kb, (out_dim,), minval=-a, maxval=a,
                               dtype=jnp.float32)
        return x, w, b

    # 1) Tiny shape typical of GroupLinearLayer usage (XLA fallback path).
    k1, k2, k3, k4 = jax.random.split(key, 4)
    x, w, b = make_inputs(k1, 2, 8, 32, 32)
    y = jax.block_until_ready(group_linear(x, w, b))
    assert y.shape == (2, 8, 32)
    assert jnp.allclose(y, x @ w.T + b, atol=1e-5, rtol=1e-5)

    # 2) Unaligned shape: weight-resident Pallas path, no padding passes.
    x, w, b = make_inputs(k2, 2, 96, 200, 160)
    y = jax.block_until_ready(group_linear(x, w, b))
    assert y.shape == (2, 96, 160)
    assert jnp.allclose(y, x @ w.T + b, atol=1e-3, rtol=1e-3)

    # 3) Aligned shape: weight-resident path with 2 M tiles (megacore-friendly).
    x, w, b = make_inputs(k3, 2, 256, 1024, 256)
    y = jax.block_until_ready(group_linear(x, w, b))
    assert y.shape == (2, 256, 256)
    assert jnp.allclose(y, x @ w.T + b, atol=1e-3, rtol=1e-3)

    # 4) Force the tiled MNK fallback path (multi-step K reduction).
    x, w, b = make_inputs(k4, 2, 128, 2304, 384)
    y = jax.block_until_ready(group_linear(x, w, b, force_pallas=True,
                                           force_path="tiled"))
    assert y.shape == (2, 128, 384)
    assert jnp.allclose(y, x @ w.T + b, atol=1e-3, rtol=1e-3)

    print("KERNEL_OK")
</pallas_src>

<mosaic_0001>
module attributes {stable_mosaic.version = 11 : i64} {
  func.func @_resident_kernel(%arg0: i32, %arg1: memref<96x200xf32, #tpu.memory_space<vmem>>, %arg2: memref<200x160xf32, #tpu.memory_space<vmem>>, %arg3: memref<1x160xf32, #tpu.memory_space<vmem>>, %arg4: memref<96x160xf32, #tpu.memory_space<vmem>>) attributes {dimension_semantics = [#tpu.dimension_semantics<parallel>], iteration_bounds = array<i64: 2>, scalar_prefetch = 0 : i64, scratch_operands = 0 : i64, tpu.core_type = #tpu.core_type<tc>, window_params = [{transform_indices = @transform_0, window_bounds = array<i64: 96, 200>}, {pipeline_mode = #tpu.pipeline_mode<synchronous>, transform_indices = @transform_1, window_bounds = array<i64: 200, 160>}, {pipeline_mode = #tpu.pipeline_mode<synchronous>, transform_indices = @transform_2, window_bounds = array<i64: 1, 160>}, {transform_indices = @transform_3, window_bounds = array<i64: 96, 160>}]} {
    %c0 = arith.constant 0 : index
    %c0_0 = arith.constant 0 : index
    %0 = vector.load %arg1[%c0, %c0_0] : memref<96x200xf32, #tpu.memory_space<vmem>>, vector<96x200xf32>
    %c0_1 = arith.constant 0 : index
    %c0_2 = arith.constant 0 : index
    %1 = vector.load %arg2[%c0_1, %c0_2] : memref<200x160xf32, #tpu.memory_space<vmem>>, vector<200x160xf32>
    %cst = arith.constant dense<0.000000e+00> : vector<96x160xf32>
    %2 = tpu.matmul %0, %1, %cst {dimension_numbers = #tpu.dot_dimension_numbers<[1], [0], [0], [1], [0, 0, 1, 1], [], []>} : vector<96x200xf32>, vector<200x160xf32>, vector<96x160xf32> -> vector<96x160xf32>
    %c0_3 = arith.constant 0 : index
    %c0_4 = arith.constant 0 : index
    %3 = vector.load %arg3[%c0_3, %c0_4] : memref<1x160xf32, #tpu.memory_space<vmem>>, vector<1x160xf32>
    %4 = vector.broadcast %3 : vector<1x160xf32> to vector<96x160xf32>
    %5 = arith.addf %2, %4 : vector<96x160xf32>
    %c0_5 = arith.constant 0 : index
    %c0_6 = arith.constant 0 : index
    %6 = vector.load %arg4[%c0_5, %c0_6] : memref<96x160xf32, #tpu.memory_space<vmem>>, vector<96x160xf32>
    tpu.vector_store %arg4[%c0_5, %c0_6], %5 {strides = array<i32>} : memref<96x160xf32, #tpu.memory_space<vmem>>, vector<96x160xf32>,
    return
  }
  func.func @transform_0(%arg0: i32) -> (i32, i32) {
    %c0_i32 = arith.constant 0 : i32
    %c0_i32_0 = arith.constant 0 : i32
    return %arg0, %c0_i32 : i32, i32
  }
  func.func @transform_1(%arg0: i32) -> (i32, i32) {
    %c0_i32 = arith.constant 0 : i32
    %c0_i32_0 = arith.constant 0 : i32
    %c0_i32_1 = arith.constant 0 : i32
    return %c0_i32, %c0_i32_0 : i32, i32
  }
  func.func @transform_2(%arg0: i32) -> (i32, i32) {
    %c0_i32 = arith.constant 0 : i32
    %c0_i32_0 = arith.constant 0 : i32
    %c0_i32_1 = arith.constant 0 : i32
    return %c0_i32, %c0_i32_0 : i32, i32
  }
  func.func @transform_3(%arg0: i32) -> (i32, i32) {
    %c0_i32 = arith.constant 0 : i32
    %c0_i32_0 = arith.constant 0 : i32
    return %arg0, %c0_i32 : i32, i32
  }
}

</mosaic_0001>

<llo_original>
// kernel: tpu_custom_call.1
$region0: #{tpu_custom_call.1}
  #allocation0 [shape = 'u32[]', space=smem, size = 0x4, offset = 0x4, fixed_abs, tag = 'smem constant byte address 0x4 - core index']
  #allocation1 [shape = 'u32[144,128]{1,0:T(1,128)}', space=vmem, size = 0x12000, scoped, tag = 'internal scratch']
  %s0 = inlined_call_operand.vmem [shape: f32[192,200], index: 0, kind: input, shape index: {}]
  %s1 = inlined_call_operand.vmem [shape: f32[200,160], index: 1, kind: input, shape index: {}]
  %s2 = inlined_call_operand.vmem [shape: f32[1,160], index: 2, kind: input, shape index: {}]
  %s3 = inlined_call_operand.vmem [shape: f32[192,160], index: 3, kind: output, shape index: {}]
  %s4 = sld [smem:[#allocation0]]
  $region45: #{tpu_custom_call.1} parent=0
    _
  %s6 = ssub.s32 1, %s4
  %s7 = scalar_select 0, %s6, %s4
  loop: start=0, step=1, limit=4
  $region2: #{tpu_custom_call.1} parent=0 // loop_pre_header
    _
  $region3: #{tpu_custom_call.1} parent=0 // loop_header
    %s9 = sphi 0, %s13
    %p10 = scmp.ge.s32.totalorder %s9, 4
    %s19 = sphi 0, %s21
    %s22 = sphi 0, %s19
    %s23 = sphi 0, %s22
    %s39 = sphi 0, %s23
    %s43 = sphi 0, %s43
    %s45 = sphi 0, %s43
    %s46 = sphi 0, %s45
    %s60 = sphi 0, %s46
    %s64 = sphi 0, %s64
    %s66 = sphi 0, %s64
    %s67 = sphi 0, %s66
    %s81 = sphi 0, %s67
    %s87 = sphi 0, %s89
    %s90 = sphi 0, %s87
    %s91 = sphi 0, %s90
    %s107 = sphi 0, %s91
  $region4: #{tpu_custom_call.1} parent=0 // loop_header_branch
    %12 = sbr.rel (%p10) target = $region8
  $region5: #{tpu_custom_call.1} parent=0 // loop_body
    %s14 = ssub.s32 %s9, 1
    %s15 = ssub.s32 %s9, 2
    %s16 = sadd.s32 %s9, 1
    %s17 = ssub.s32 %s9, %s16
    %p18 = scmp.eq.s32.totalorder %s17, 0
    %s20 = sadd.s32 %s19, 1
    %s21 = scalar_select %p18, %s19, %s20
    %p24 = pneg %p18
    %p25 = scmp.eq.s32.totalorder %s9, 1
    %p26 = por %p24, %p25
    %p27 = scmp.ne.s32.totalorder %s19, %s22
    %p28 = scmp.eq.s32.totalorder %s9, 0
    %p29 = por %p27, %p28
    %p30 = scmp.ne.s32.totalorder %s19, %s22
    %p31 = scmp.eq.s32.totalorder %s14, 1
    %p32 = por %p30, %p31
    %p33 = scmp.ne.s32.totalorder %s22, %s23
    %p34 = scmp.eq.s32.totalorder %s14, 0
    %p35 = por %p33, %p34
    %p36 = scmp.ne.s32.totalorder %s22, %s23
    %p37 = scmp.eq.s32.totalorder %s15, 1
    %p38 = por %p36, %p37
    %p40 = scmp.ne.s32.totalorder %s23, %s39
    %p41 = scmp.eq.s32.totalorder %s15, 0
    %p42 = por %p40, %p41
    %s44 = sadd.s32 %s43, 1
    %p47 = scmp.eq.s32.totalorder %s9, 1
    %p48 = scmp.ne.s32.totalorder %s43, %s45
    %p49 = scmp.eq.s32.totalorder %s9, 0
    %p50 = por %p48, %p49
    %p51 = scmp.ne.s32.totalorder %s43, %s45
    %p52 = scmp.eq.s32.totalorder %s14, 1
    %p53 = por %p51, %p52
    %p54 = scmp.ne.s32.totalorder %s45, %s46
    %p55 = scmp.eq.s32.totalorder %s14, 0
    %p56 = por %p54, %p55
    %p57 = scmp.ne.s32.totalorder %s45, %s46
    %p58 = scmp.eq.s32.totalorder %s15, 1
    %p59 = por %p57, %p58
    %p61 = scmp.ne.s32.totalorder %s46, %s60
    %p62 = scmp.eq.s32.totalorder %s15, 0
    %p63 = por %p61, %p62
    %s65 = sadd.s32 %s64, 1
    %p68 = scmp.eq.s32.totalorder %s9, 1
    %p69 = scmp.ne.s32.totalorder %s64, %s66
    %p70 = scmp.eq.s32.totalorder %s9, 0
    %p71 = por %p69, %p70
    %p72 = scmp.ne.s32.totalorder %s64, %s66
    %p73 = scmp.eq.s32.totalorder %s14, 1
    %p74 = por %p72, %p73
    %p75 = scmp.ne.s32.totalorder %s66, %s67
    %p76 = scmp.eq.s32.totalorder %s14, 0
    %p77 = por %p75, %p76
    %p78 = scmp.ne.s32.totalorder %s66, %s67
    %p79 = scmp.eq.s32.totalorder %s15, 1
    %p80 = por %p78, %p79
    %p82 = scmp.ne.s32.totalorder %s67, %s81
    %p83 = scmp.eq.s32.totalorder %s15, 0
    %p84 = por %p82, %p83
    %s85 = ssub.s32 %s9, %s16
    %p86 = scmp.eq.s32.totalorder %s85, 0
    %s88 = sadd.s32 %s87, 1
    %s89 = scalar_select %p86, %s87, %s88
    %p92 = pneg %p86
    %p93 = scmp.eq.s32.totalorder %s9, 1
    %p94 = por %p92, %p93
    %p95 = scmp.ne.s32.totalorder %s87, %s90
    %p96 = scmp.eq.s32.totalorder %s9, 0
    %p97 = por %p95, %p96
    %p98 = scmp.ne.s32.totalorder %s87, %s90
    %p99 = scmp.eq.s32.totalorder %s14, 1
    %p100 = por %p98, %p99
    %p101 = scmp.ne.s32.totalorder %s90, %s91
    %p102 = scmp.eq.s32.totalorder %s14, 0
    %p103 = por %p101, %p102
    %p104 = scmp.ne.s32.totalorder %s90, %s91
    %p105 = scmp.eq.s32.totalorder %s15, 1
    %p106 = por %p104, %p105
    %p108 = scmp.ne.s32.totalorder %s91, %s107
    %p109 = scmp.eq.s32.totalorder %s15, 0
    %p110 = por %p108, %p109
    %p111 = scmp.le.s32.totalorder 1, %s9
    %p112 = scmp.lt.s32.totalorder %s9, 3
    %p113 = pnand %p111, %p112
    %p114 = pneg %p113
    // Predicated region
    $region9: #{tpu_custom_call.1} parent=5 // pred_check
      _
    $region10: #{tpu_custom_call.1} parent=5 // pred_check_branch
      %116 = sbr.rel (%p113) target = $region12
    $region11: #{tpu_custom_call.1} parent=5 // pred_region
      %s117 = ssub.s32 %s9, 1
      // Predicated region
      $region13: #{tpu_custom_call.1} parent=11 // pred_check
        %p118 = pneg %p56
      $region14: #{tpu_custom_call.1} parent=11 // pred_check_branch
        %120 = sbr.rel (%p118) target = $region16
      $region15: #{tpu_custom_call.1} parent=11 // pred_region
        _
      $region16: #{tpu_custom_call.1} parent=11 // pred_fallthru
        _
      // Predicated region
      $region17: #{tpu_custom_call.1} parent=11 // pred_check
        %p121 = pneg %p77
      $region18: #{tpu_custom_call.1} parent=11 // pred_check_branch
        %123 = sbr.rel (%p121) target = $region20
      $region19: #{tpu_custom_call.1} parent=11 // pred_region
        _
      $region20: #{tpu_custom_call.1} parent=11 // pred_fallthru
        _
    $region12: #{tpu_custom_call.1} parent=5 // pred_fallthru
      _
    %p124 = scmp.lt.s32.totalorder %s9, 2
    // Predicated region
    $region21: #{tpu_custom_call.1} parent=5 // pred_check
      %p125 = pneg %p124
    $region22: #{tpu_custom_call.1} parent=5 // pred_check_branch
      %127 = sbr.rel (%p125) target = $region24
    $region23: #{tpu_custom_call.1} parent=5 // pred_region
      // Predicated region
      $region25: #{tpu_custom_call.1} parent=23 // pred_check
        %p128 = pneg %p29
      $region26: #{tpu_custom_call.1} parent=23 // pred_check_branch
        %130 = sbr.rel (%p128) target = $region28
      $region27: #{tpu_custom_call.1} parent=23 // pred_region
        %s131 = smul.u32 12, %s9
        %p132 = scmp.lt.s32.totalorder %s131, 23
        %s133 = scalar_select %p132, %s131, 23
        %s134 = smul.addr %s133, 2
        %s135 = smul.addr %s134, 8
        %s136 = scalar_lea.vmem %s0, %s135
        %s137 = smul.u32 12, %s9
      $region28: #{tpu_custom_call.1} parent=23 // pred_fallthru
        _
    $region24: #{tpu_custom_call.1} parent=5 // pred_fallthru
      _
    %p138 = scmp.le.s32.totalorder 1, %s9
    %p139 = scmp.lt.s32.totalorder %s9, 3
    %p140 = pnand %p138, %p139
    %p141 = pneg %p140
    // Predicated region
    $region29: #{tpu_custom_call.1} parent=5 // pred_check
      _
    $region30: #{tpu_custom_call.1} parent=5 // pred_check_branch
      %143 = sbr.rel (%p140) target = $region32
    $region31: #{tpu_custom_call.1} parent=5 // pred_region
      %s144 = ssub.s32 %s9, 1
      %s145 = smul.u32 12, %s14
      %p146 = scmp.lt.s32.totalorder %s145, 23
      %s147 = scalar_select %p146, %s145, 23
      %s148 = smul.addr %s147, 2
      %s149 = smul.addr %s148, 8
      %s150 = scalar_lea.vmem %s0, %s149
      %p151 = pneg %p35
      %p152 = pneg %p32
      %p153 = pneg %p56
      %p154 = pneg %p53
      %p155 = pneg %p77
      %p156 = pneg %p74
      %p157 = pneg %p103
      %p158 = pneg %p100
      %s159 = smul.u32 12, %s14
      %p160 = scmp.lt.s32.totalorder %s159, 23
      %s161 = scalar_select %p160, %s159, 23
      %s162 = smul.addr %s161, 2
      %s163 = smul.addr %s162, 8
      %s164 = scalar_lea.vmem %s3, %s163
      %s165 = smul.u32 12, %s14
      %p166 = scmp.lt.s32.totalorder %s165, 23
      %s167 = scalar_select %p166, %s165, 23
      %s168 = smul.addr %s167, 2
      %s169 = smul.addr %s168, 8
      %s170 = scalar_lea.vmem %s0, %s169
      %s171 = smul.u32 12, %s14
      %s172 = smul.u32 12, %s14
      %p173 = scmp.lt.s32.totalorder %s172, 23
      %s174 = scalar_select %p173, %s172, 23
      %s175 = smul.addr %s174, 2
      %s176 = smul.addr %s175, 8
      %s177 = scalar_lea.vmem %s3, %s176
      %s178 = smul.u32 12, %s14
      %v179 = vld [vmem:[%s170] sm:$0xff]
      %v180 = vld [vmem:[%s170 + $0x8] sm:$0xff]
      %v181 = vld [vmem:[%s170 + $0x10] sm:$0xff]
      %v182 = vld [vmem:[%s170 + $0x18] sm:$0xff]
      %v183 = vld [vmem:[%s170 + $0x20] sm:$0xff]
      %v184 = vld [vmem:[%s170 + $0x28] sm:$0xff]
      %v185 = vld [vmem:[%s170 + $0x30] sm:$0xff]
      %v186 = vld [vmem:[%s170 + $0x38] sm:$0xff]
      %v187 = vld [vmem:[%s170 + $0x40] sm:$0xff]
      %v188 = vld [vmem:[%s170 + $0x48] sm:$0xff]
      %v189 = vld [vmem:[%s170 + $0x50] sm:$0xff]
      %v190 = vld [vmem:[%s170 + $0x58] sm:$0xff]
      %v191 = vld [vmem:[%s170 + $0x60] sm:$0xff]
      %v192 = vld [vmem:[%s170 + $0x68] sm:$0xff]
      %v193 = vld [vmem:[%s170 + $0x70] sm:$0xff]
      %v194 = vld [vmem:[%s170 + $0x78] sm:$0xff]
      %v195 = vld [vmem:[%s170 + $0x80] sm:$0xff]
      %v196 = vld [vmem:[%s170 + $0x88] sm:$0xff]
      %v197 = vld [vmem:[%s170 + $0x90] sm:$0xff]
      %v198 = vld [vmem:[%s170 + $0x98] sm:$0xff]
      %v199 = vld [vmem:[%s170 + $0xa0] sm:$0xff]
      %v200 = vld [vmem:[%s170 + $0xa8] sm:$0xff]
      %v201 = vld [vmem:[%s170 + $0xb0] sm:$0xff]
      %v202 = vld [vmem:[%s170 + $0xb8] sm:$0xff]
      %v203 = vld [vmem:[%s1] sm:$0xff]
      %v204 = vld [vmem:[%s1 + $0x8] sm:$0xff]
      %v205 = vld [vmem:[%s1 + $0x10] sm:$0xff]
      %v206 = vld [vmem:[%s1 + $0x18] sm:$0xff]
      %v207 = vld [vmem:[%s1 + $0x20] sm:$0xff]
      %v208 = vld [vmem:[%s1 + $0x28] sm:$0xff]
      %v209 = vld [vmem:[%s1 + $0x30] sm:$0xff]
      %v210 = vld [vmem:[%s1 + $0x38] sm:$0xff]
      %v211 = vld [vmem:[%s1 + $0x40] sm:$0xff]
      %v212 = vld [vmem:[%s1 + $0x48] sm:$0xff]
      %v213 = vld [vmem:[%s1 + $0x50] sm:$0xff]
      %v214 = vld [vmem:[%s1 + $0x58] sm:$0xff]
      %v215 = vld [vmem:[%s1 + $0x60] sm:$0xff]
      %v216 = vld [vmem:[%s1 + $0x68] sm:$0xff]
      %v217 = vld [vmem:[%s1 + $0x70] sm:$0xff]
      %v218 = vld [vmem:[%s1 + $0x78] sm:$0xff]
      %v219 = vld [vmem:[%s1 + $0x80] sm:$0xff]
      %v220 = vld [vmem:[%s1 + $0x88] sm:$0xff]
      %v221 = vld [vmem:[%s1 + $0x90] sm:$0xff]
      %v222 = vld [vmem:[%s1 + $0x98] sm:$0xff]
      %v223 = vld [vmem:[%s1 + $0xa0] sm:$0xff]
      %v224 = vld [vmem:[%s1 + $0xa8] sm:$0xff]
      %v225 = vld [vmem:[%s1 + $0xb0] sm:$0xff]
      %v226 = vld [vmem:[%s1 + $0xb8] sm:$0xff]
      %v227 = vld [vmem:[%s1 + $0xc0] sm:$0xff]
      %v228 = vld [vmem:[%s1 + $0xc8] sm:$0xff]
      %v229 = vld [vmem:[%s1 + $0xd0] sm:$0xff]
      %v230 = vld [vmem:[%s1 + $0xd8] sm:$0xff]
      %v231 = vld [vmem:[%s1 + $0xe0] sm:$0xff]
      %v232 = vld [vmem:[%s1 + $0xe8] sm:$0xff]
      %v233 = vld [vmem:[%s1 + $0xf0] sm:$0xff]
      %v234 = vld [vmem:[%s1 + $0xf8] sm:$0xff]
      %v235 = vld [vmem:[%s1 + $0x100] sm:$0xff]
      %v236 = vld [vmem:[%s1 + $0x108] sm:$0xff]
      %v237 = vld [vmem:[%s1 + $0x110] sm:$0xff]
      %v238 = vld [vmem:[%s1 + $0x118] sm:$0xff]
      %v239 = vld [vmem:[%s1 + $0x120] sm:$0xff]
      %v240 = vld [vmem:[%s1 + $0x128] sm:$0xff]
      %v241 = vld [vmem:[%s1 + $0x130] sm:$0xff]
      %v242 = vld [vmem:[%s1 + $0x138] sm:$0xff]
      %v243 = vld [vmem:[%s1 + $0x140] sm:$0xff]
      %v244 = vld [vmem:[%s1 + $0x148] sm:$0xff]
      %v245 = vld [vmem:[%s1 + $0x150] sm:$0xff]
      %v246 = vld [vmem:[%s1 + $0x158] sm:$0xff]
      %v247 = vld [vmem:[%s1 + $0x160] sm:$0xff]
      %v248 = vld [vmem:[%s1 + $0x168] sm:$0xff]
      %v249 = vld [vmem:[%s1 + $0x170] sm:$0xff]
      %v250 = vld [vmem:[%s1 + $0x178] sm:$0xff]
      %v251 = vld [vmem:[%s1 + $0x180] sm:$0xff]
      %v252 = vld [vmem:[%s1 + $0x188] sm:$0xff]
      %v253 = vld [vmem:[%s2] sm:$0x3]
      %v255 = vlaneseq
      %v256 = vshrl.u32 %v255, 7
      %v257 = vsub.s32 0, %v256
      %v258 = vrot.slane %v253, %v257
      %v259 = vlaneseq
      %v260 = vshrl.u32 %v259, 7
      %v261 = vsub.s32 1, %v260
      %v262 = vrot.slane %v253, %v261
      %vm265 = vcmask 588800
      %v267 = vsel %vm265, %v180, 0
      %v270 = vsel %vm265, %v182, 0
      %v273 = vsel %vm265, %v184, 0
      %v276 = vsel %vm265, %v186, 0
      %v279 = vsel %vm265, %v188, 0
      %v282 = vsel %vm265, %v190, 0
      %v285 = vsel %vm265, %v192, 0
      %v288 = vsel %vm265, %v194, 0
      %v291 = vsel %vm265, %v196, 0
      %v294 = vsel %vm265, %v198, 0
      %v297 = vsel %vm265, %v200, 0
      %v300 = vsel %vm265, %v202, 0
      %302 = vmatprep.subr.mxu0 %v234
      %303 = vmatpush1.msra.mxu0 %v233
      %304 = vmatprep.subr.mxu0 %v232
      %305 = vmatpush1.msra.mxu0 %v231
      %306 = vmatprep.subr.mxu0 %v230
      %307 = vmatpush1.msra.mxu0 %v229
      %308 = vmatprep.subr.mxu0 %v228
      %309 = vmatpush1.msra.mxu0 %v227
      %310 = vmatprep.subr.mxu0 %v226
      %311 = vmatpush1.msra.mxu0 %v225
      %312 = vmatprep.subr.mxu0 %v224
      %313 = vmatpush1.msra.mxu0 %v223
      %314 = vmatprep.subr.mxu0 %v222
      %315 = vmatpush1.msra.mxu0 %v221
      %316 = vmatprep.subr.mxu0 %v220
      %317 = vmatpush1.msra.mxu0 %v219
      %318 = vmatprep.subr.mxu0 %v218
      %319 = vmatpush1.msra.mxu0 %v217
      %320 = vmatprep.subr.mxu0 %v216
      %321 = vmatpush1.msra.mxu0 %v215
      %322 = vmatprep.subr.mxu0 %v214
      %323 = vmatpush1.msra.mxu0 %v213
      %324 = vmatprep.subr.mxu0 %v212
      %325 = vmatpush1.msra.mxu0 %v211
      %326 = vmatprep.subr.mxu0 %v210
      %327 = vmatpush1.msra.mxu0 %v209
      %328 = vmatprep.subr.mxu0 %v208
      %329 = vmatpush1.msra.mxu0 %v207
      %330 = vmatprep.subr.mxu0 %v206
      %331 = vmatpush1.msra.mxu0 %v205
      %332 = vmatprep.subr.mxu0 %v204
      %333 = vmatpush1.msra.mxu0 %v203
      %334 = vmatprep.subr.mxu0 0.0
      %335 = vmatpush2.msra.mxu0 0.0
      %336 = vmatprep.subr.mxu0 0.0
      %337 = vmatpush2.msra.mxu0 0.0
      %338 = vmatprep.subr.mxu0 0.0
      %339 = vmatpush2.msra.mxu0 0.0
      %340 = vmatprep.subr.mxu0 0.0
      %341 = vmatpush2.msra.mxu0 0.0
      %342 = vmatprep.subr.mxu0 0.0
      %343 = vmatpush2.msra.mxu0 0.0
      %344 = vmatprep.subr.mxu0 0.0
      %345 = vmatpush2.msra.mxu0 0.0
      %346 = vmatprep.subr.mxu0 0.0
      %347 = vmatpush2.msra.mxu0 0.0
      %348 = vmatprep.subr.mxu0 %v252
      %349 = vmatpush2.msra.mxu0 %v251
      %350 = vmatprep.subr.mxu0 %v250
      %351 = vmatpush2.msra.mxu0 %v249
      %352 = vmatprep.subr.mxu0 %v248
      %353 = vmatpush2.msra.mxu0 %v247
      %354 = vmatprep.subr.mxu0 %v246
      %355 = vmatpush2.msra.mxu0 %v245
      %356 = vmatprep.subr.mxu0 %v244
      %357 = vmatpush2.msra.mxu0 %v243
      %358 = vmatprep.subr.mxu0 %v242
      %359 = vmatpush2.msra.mxu0 %v241
      %360 = vmatprep.subr.mxu0 %v240
      %361 = vmatpush2.msra.mxu0 %v239
      %362 = vmatprep.subr.mxu0 %v238
      %363 = vmatpush2.msra.mxu0 %v237
      %364 = vmatprep.subr.mxu0 %v236
      %365 = vmatpush2.msra.mxu0 %v235
      %366 = vmatprep.mubr.f32.mxu0 %v267
      %367 = vmatmul.mubr.f32.gmra.mxu0 %v179
      %v368 = vpop.f32.mrf.mxu0
      %v369 = vadd.f32 %v258, %v368
      %v370 = vpop.f32.mrf.mxu0
      %v371 = vadd.f32 %v262, %v370
      %372 = vmatprep.mubr.f32.mxu0 %v270
      %373 = vmatmul.mubr.f32.gmra.mxu0 %v181
      %v374 = vpop.f32.mrf.mxu0
      %v375 = vadd.f32 %v258, %v374
      %v376 = vpop.f32.mrf.mxu0
      %v377 = vadd.f32 %v262, %v376
      %378 = vmatprep.mubr.f32.mxu0 %v273
      %379 = vmatmul.mubr.f32.gmra.mxu0 %v183
      %v380 = vpop.f32.mrf.mxu0
      %v381 = vadd.f32 %v258, %v380
      %v382 = vpop.f32.mrf.mxu0
      %v383 = vadd.f32 %v262, %v382
      %384 = vmatprep.mubr.f32.mxu0 %v276
      %385 = vmatmul.mubr.f32.gmra.mxu0 %v185
      %v386 = vpop.f32.mrf.mxu0
      %v387 = vadd.f32 %v258, %v386
      %v388 = vpop.f32.mrf.mxu0
      %v389 = vadd.f32 %v262, %v388
      %390 = vmatprep.mubr.f32.mxu0 %v279
      %391 = vmatmul.mubr.f32.gmra.mxu0 %v187
      %v392 = vpop.f32.mrf.mxu0
      %v393 = vadd.f32 %v258, %v392
      %v394 = vpop.f32.mrf.mxu0
      %v395 = vadd.f32 %v262, %v394
      %396 = vmatprep.mubr.f32.mxu0 %v282
      %397 = vmatmul.mubr.f32.gmra.mxu0 %v189
      %v398 = vpop.f32.mrf.mxu0
      %v399 = vadd.f32 %v258, %v398
      %v400 = vpop.f32.mrf.mxu0
      %v401 = vadd.f32 %v262, %v400
      %402 = vmatprep.mubr.f32.mxu0 %v285
      %403 = vmatmul.mubr.f32.gmra.mxu0 %v191
      %v404 = vpop.f32.mrf.mxu0
      %v405 = vadd.f32 %v258, %v404
      %v406 = vpop.f32.mrf.mxu0
      %v407 = vadd.f32 %v262, %v406
      %408 = vmatprep.mubr.f32.mxu0 %v288
      %409 = vmatmul.mubr.f32.gmra.mxu0 %v193
      %v410 = vpop.f32.mrf.mxu0
      %v411 = vadd.f32 %v258, %v410
      %v412 = vpop.f32.mrf.mxu0
      %v413 = vadd.f32 %v262, %v412
      %414 = vmatprep.mubr.f32.mxu0 %v291
      %415 = vmatmul.mubr.f32.gmra.mxu0 %v195
      %v416 = vpop.f32.mrf.mxu0
      %v417 = vadd.f32 %v258, %v416
      %v418 = vpop.f32.mrf.mxu0
      %v419 = vadd.f32 %v262, %v418
      %420 = vmatprep.mubr.f32.mxu0 %v294
      %421 = vmatmul.mubr.f32.gmra.mxu0 %v197
      %v422 = vpop.f32.mrf.mxu0
      %v423 = vadd.f32 %v258, %v422
      %v424 = vpop.f32.mrf.mxu0
      %v425 = vadd.f32 %v262, %v424
      %426 = vmatprep.mubr.f32.mxu0 %v297
      %427 = vmatmul.mubr.f32.gmra.mxu0 %v199
      %v428 = vpop.f32.mrf.mxu0
      %v429 = vadd.f32 %v258, %v428
      %v430 = vpop.f32.mrf.mxu0
      %v431 = vadd.f32 %v262, %v430
      %432 = vmatprep.mubr.f32.mxu0 %v300
      %433 = vmatmul.mubr.f32.gmra.mxu0 %v201
      %v434 = vpop.f32.mrf.mxu0
      %v435 = vadd.f32 %v258, %v434
      %v436 = vpop.f32.mrf.mxu0
      %v437 = vadd.f32 %v262, %v436
      %438 = vdwg.mxu0
      %439 = vst [vmem:[%s177] sm:$0xff] %v369
      %vm440 = vcmask 261120
      %441 = vst.msk [vmem:[%s177 + $0x8] sm:$0xff] %vm440, %v371
      %442 = vst [vmem:[%s177 + $0x10] sm:$0xff] %v375
      %443 = vst.msk [vmem:[%s177 + $0x18] sm:$0xff] %vm440, %v377
      %444 = vst [vmem:[%s177 + $0x20] sm:$0xff] %v381
      %445 = vst.msk [vmem:[%s177 + $0x28] sm:$0xff] %vm440, %v383
      %446 = vst [vmem:[%s177 + $0x30] sm:$0xff] %v387
      %447 = vst.msk [vmem:[%s177 + $0x38] sm:$0xff] %vm440, %v389
      %448 = vst [vmem:[%s177 + $0x40] sm:$0xff] %v393
      %449 = vst.msk [vmem:[%s177 + $0x48] sm:$0xff] %vm440, %v395
      %450 = vst [vmem:[%s177 + $0x50] sm:$0xff] %v399
      %451 = vst.msk [vmem:[%s177 + $0x58] sm:$0xff] %vm440, %v401
      %452 = vst [vmem:[%s177 + $0x60] sm:$0xff] %v405
      %453 = vst.msk [vmem:[%s177 + $0x68] sm:$0xff] %vm440, %v407
      %454 = vst [vmem:[%s177 + $0x70] sm:$0xff] %v411
      %455 = vst.msk [vmem:[%s177 + $0x78] sm:$0xff] %vm440, %v413
      %456 = vst [vmem:[%s177 + $0x80] sm:$0xff] %v417
      %457 = vst.msk [vmem:[%s177 + $0x88] sm:$0xff] %vm440, %v419
      %458 = vst [vmem:[%s177 + $0x90] sm:$0xff] %v423
      %459 = vst.msk [vmem:[%s177 + $0x98] sm:$0xff] %vm440, %v425
      %460 = vst [vmem:[%s177 + $0xa0] sm:$0xff] %v429
      %461 = vst.msk [vmem:[%s177 + $0xa8] sm:$0xff] %vm440, %v431
      %462 = vst [vmem:[%s177 + $0xb0] sm:$0xff] %v435
      %463 = vst.msk [vmem:[%s177 + $0xb8] sm:$0xff] %vm440, %v437
      %s464 = smul.u32 12, %s14
      %p465 = scmp.lt.s32.totalorder %s464, 23
      %s466 = scalar_select %p465, %s464, 23
      %s467 = smul.addr %s466, 2
      %s468 = smul.addr %s467, 8
      %s469 = scalar_lea.vmem %s3, %s468
      // Predicated region
      $region33: #{tpu_custom_call.1} parent=31 // pred_check
        %p470 = pneg %p100
      $region34: #{tpu_custom_call.1} parent=31 // pred_check_branch
        %472 = sbr.rel (%p470) target = $region36
      $region35: #{tpu_custom_call.1} parent=31 // pred_region
        %s473 = smul.u32 12, %s14
      $region36: #{tpu_custom_call.1} parent=31 // pred_fallthru
        _
    $region32: #{tpu_custom_call.1} parent=5 // pred_fallthru
      _
    %p474 = scmp.le.s32.totalorder 2, %s9
    // Predicated region
    $region37: #{tpu_custom_call.1} parent=5 // pred_check
      %p475 = pneg %p474
    $region38: #{tpu_custom_call.1} parent=5 // pred_check_branch
      %477 = sbr.rel (%p475) target = $region40
    $region39: #{tpu_custom_call.1} parent=5 // pred_region
      %s478 = ssub.s32 %s9, 2
      // Predicated region
      $region41: #{tpu_custom_call.1} parent=39 // pred_check
        %p479 = pneg %p106
      $region42: #{tpu_custom_call.1} parent=39 // pred_check_branch
        %481 = sbr.rel (%p479) target = $region44
      $region43: #{tpu_custom_call.1} parent=39 // pred_region
        %s482 = smul.u32 12, %s15
        %p483 = scmp.lt.s32.totalorder %s482, 23
        %s484 = scalar_select %p483, %s482, 23
        %s485 = smul.addr %s484, 2
        %s486 = smul.addr %s485, 8
        %s487 = scalar_lea.vmem %s3, %s486
      $region44: #{tpu_custom_call.1} parent=39 // pred_fallthru
        _
    $region40: #{tpu_custom_call.1} parent=5 // pred_fallthru
      _
  $region6: #{tpu_custom_call.1} parent=0 // loop_footer
    %s13 = sadd.s32 1, %s9
  $region7: #{tpu_custom_call.1} parent=0 // loop_footer_branch
    %8 = sbr.rel target = $region3
  $region8: #{tpu_custom_call.1} parent=0 // loop_exit
    _

</llo_original>
